<compile_context>
chip_gen: v5e
topology: v5e:2x2
jax: 0.10.0
libtpu: 0.0.40
codegen_flags: <defaults>
</compile_context>

<pallas_src>
import jax
import jax.numpy as jnp
import numpy as np
from jax.experimental import pallas as pl
from jax.experimental.pallas import tpu as pltpu


def _cdiv(a: int, b: int) -> int:
    return -(-a // b)


def _round_up(a: int, m: int) -> int:
    return _cdiv(a, m) * m


def _choose_tiles(rows: int, lanes: int, itemsize: int, row_unit: int):
    """Byte-budget tile selection: lane-dense, ~TARGET bytes per block."""
    LANE_UNIT = 128
    TARGET_BLOCK_BYTES = 4 << 20   # ~4 MiB blocks: near HBM roofline on v6e,
                                   # amortizes per-step overhead on v7x.
    MAX_TILE_L = 8192

    lanes_padded = _round_up(lanes, LANE_UNIT)
    rows_padded = _round_up(rows, row_unit)

    tile_l = min(lanes_padded, MAX_TILE_L)

    tile_r = TARGET_BLOCK_BYTES // (tile_l * itemsize)
    tile_r = max(row_unit, (tile_r // row_unit) * row_unit)
    tile_r = min(tile_r, rows_padded)

    # Megacore (v7x): make sure at least one "parallel" grid axis has >= 2
    # blocks so both TensorCores get work.  Harmless on v5e/v6e (1 TC).
    if _cdiv(rows, tile_r) * _cdiv(lanes, tile_l) < 2:
        if rows_padded > row_unit and tile_r > row_unit:
            tile_r = max(row_unit, (rows_padded // 2 // row_unit) * row_unit)
        elif lanes_padded > LANE_UNIT and tile_l > LANE_UNIT:
            tile_l = max(LANE_UNIT, (lanes_padded // 2 // LANE_UNIT) * LANE_UNIT)

    return tile_r, tile_l


def _make_normalize_kernel(tile_r: int, row_unit: int):
    def kernel(scale_ref, bias_ref, x_ref, o_ref):
        # scale_ref / bias_ref: grid-resident (padded_rows, 1) f32 columns.
        # x_ref / o_ref:        (tile_r, tile_l) lane-dense tiles.
        r0 = pl.multiple_of(pl.program_id(0) * tile_r, row_unit)
        s = scale_ref[pl.ds(r0, tile_r), :]
        b = bias_ref[pl.ds(r0, tile_r), :]
        # f32 FMA regardless of input dtype; single cast at the store.
        o_ref[...] = (x_ref[...].astype(jnp.float32) * s + b).astype(o_ref.dtype)

    return kernel


def normalize_layer(x: jax.Array, means: jax.Array, sds: jax.Array) -> jax.Array:
    """Pallas equivalent of NormalizeLayer.forward: (x - mean[c]) / sd[c]."""
    n, c, h, w = x.shape
    assert means.shape == (c,) and sds.shape == (c,)

    rows, lanes = n * c, h * w
    x2 = x.reshape(rows, lanes)   # lane-dense: one row per (batch, channel)

    # Fold the divide into a multiply-add, precomputed once in f32:
    #   out = x * (1/sd) + (-mean/sd)
    inv = 1.0 / sds.astype(jnp.float32)                              # (c,)
    scale = jnp.tile(inv, n).reshape(rows, 1)                        # row r -> chan r % c
    bias = jnp.tile(-means.astype(jnp.float32) * inv, n).reshape(rows, 1)

    itemsize = x.dtype.itemsize
    row_unit = max(8, 32 // itemsize)     # 8 f32 / 16 bf16 / 32 int8 (sublane packing)

    tile_r, tile_l = _choose_tiles(rows, lanes, itemsize, row_unit)
    grid = (_cdiv(rows, tile_r), _cdiv(lanes, tile_l))

    # Pad scale/bias rows so the in-kernel pl.ds slice on the last (ragged)
    # row tile never reads out of bounds.  Footprint is ~512 B per padded row
    # (1 lane used per (8,128) tile) -- negligible for N*C rows.
    padded_rows = grid[0] * tile_r
    if padded_rows > rows:
        pad = padded_rows - rows
        scale = jnp.pad(scale, ((0, pad), (0, 0)))
        bias = jnp.pad(bias, ((0, pad), (0, 0)))

    kernel = _make_normalize_kernel(tile_r, row_unit)

    out2 = pl.pallas_call(
        kernel,
        out_shape=jax.ShapeDtypeStruct((rows, lanes), x.dtype),
        grid=grid,
        in_specs=[
            pl.BlockSpec((padded_rows, 1), lambda i, j: (0, 0)),     # scale (resident)
            pl.BlockSpec((padded_rows, 1), lambda i, j: (0, 0)),     # bias  (resident)
            pl.BlockSpec((tile_r, tile_l), lambda i, j: (i, j)),     # x
        ],
        out_specs=pl.BlockSpec((tile_r, tile_l), lambda i, j: (i, j)),
        compiler_params=pltpu.CompilerParams(
            dimension_semantics=("parallel", "parallel"),
            # Double-buffered 4 MiB in + 4 MiB out (16 MiB) + resident scale/bias:
            # above the 16 MiB v5e scoped default, well under v7x's 64 MiB physical.
            vmem_limit_bytes=48 * 1024 * 1024,
        ),
    )(scale, bias, x2)

    return out2.reshape(n, c, h, w)


if __name__ == "__main__":
    # Deterministic per-channel "parameters", C = 4.
    means = jnp.array([0.4914, 0.4822, 0.4465, 0.5000], dtype=jnp.float32)
    sds = jnp.array([0.2023, 0.1994, 0.2010, 0.2000], dtype=jnp.float32)

    # Deterministic input: NCHW, batch=2, channels=4, spatial=16x16.
    key = jax.random.PRNGKey(0)
    x = jax.random.uniform(key, (2, 4, 16, 16), dtype=jnp.float32)

    out = normalize_layer(x, means, sds)
    out = jax.block_until_ready(out)

    # Reference check (pure JAX broadcast, matches PyTorch semantics).
    # Slightly looser tolerance: kernel computes x*(1/sd) + (-mean/sd),
    # a couple of ulps apart from (x - mean)/sd in f32.
    ref = (x - means[None, :, None, None]) / sds[None, :, None, None]
    np.testing.assert_allclose(np.asarray(out), np.asarray(ref), rtol=1e-5, atol=1e-5)

    print("KERNEL_OK")
</pallas_src>

<mosaic_0001>
module attributes {stable_mosaic.version = 11 : i64} {
  func.func @kernel(%arg0: i32, %arg1: i32, %arg2: memref<8x1xf32, #tpu.memory_space<vmem>>, %arg3: memref<8x1xf32, #tpu.memory_space<vmem>>, %arg4: memref<8x128xf32, #tpu.memory_space<vmem>>, %arg5: memref<8x128xf32, #tpu.memory_space<vmem>>) attributes {dimension_semantics = [#tpu.dimension_semantics<parallel>, #tpu.dimension_semantics<parallel>], iteration_bounds = array<i64: 1, 2>, scalar_prefetch = 0 : i64, scratch_operands = 0 : i64, tpu.core_type = #tpu.core_type<tc>, window_params = [{pipeline_mode = #tpu.pipeline_mode<synchronous>, transform_indices = @transform_0, window_bounds = array<i64: 8, 1>}, {pipeline_mode = #tpu.pipeline_mode<synchronous>, transform_indices = @transform_1, window_bounds = array<i64: 8, 1>}, {transform_indices = @transform_2, window_bounds = array<i64: 8, 128>}, {transform_indices = @transform_3, window_bounds = array<i64: 8, 128>}]} {
    %c8_i32 = arith.constant 8 : i32
    %0 = arith.muli %arg0, %c8_i32 : i32
    %1 = tpu.assume_multiple %0, 8 : i32
    %2 = arith.index_cast %1 : i32 to index
    %c0 = arith.constant 0 : index
    %3 = vector.load %arg2[%2, %c0] : memref<8x1xf32, #tpu.memory_space<vmem>>, vector<8x1xf32>
    %4 = arith.index_cast %1 : i32 to index
    %c0_0 = arith.constant 0 : index
    %5 = vector.load %arg3[%4, %c0_0] : memref<8x1xf32, #tpu.memory_space<vmem>>, vector<8x1xf32>
    %c0_1 = arith.constant 0 : index
    %c0_2 = arith.constant 0 : index
    %6 = vector.load %arg4[%c0_1, %c0_2] : memref<8x128xf32, #tpu.memory_space<vmem>>, vector<8x128xf32>
    %7 = vector.broadcast %3 : vector<8x1xf32> to vector<8x128xf32>
    %8 = arith.mulf %6, %7 : vector<8x128xf32>
    %9 = vector.broadcast %5 : vector<8x1xf32> to vector<8x128xf32>
    %10 = arith.addf %8, %9 : vector<8x128xf32>
    %c0_3 = arith.constant 0 : index
    %c0_4 = arith.constant 0 : index
    %11 = vector.load %arg5[%c0_3, %c0_4] : memref<8x128xf32, #tpu.memory_space<vmem>>, vector<8x128xf32>
    tpu.vector_store %arg5[%c0_3, %c0_4], %10 {strides = array<i32>} : memref<8x128xf32, #tpu.memory_space<vmem>>, vector<8x128xf32>,
    return
  }
  func.func @transform_0(%arg0: i32, %arg1: i32) -> (i32, i32) {
    %c0_i32 = arith.constant 0 : i32
    %c0_i32_0 = arith.constant 0 : i32
    %c0_i32_1 = arith.constant 0 : i32
    return %c0_i32, %c0_i32_0 : i32, i32
  }
  func.func @transform_1(%arg0: i32, %arg1: i32) -> (i32, i32) {
    %c0_i32 = arith.constant 0 : i32
    %c0_i32_0 = arith.constant 0 : i32
    %c0_i32_1 = arith.constant 0 : i32
    return %c0_i32, %c0_i32_0 : i32, i32
  }
  func.func @transform_2(%arg0: i32, %arg1: i32) -> (i32, i32) {
    %c0_i32 = arith.constant 0 : i32
    return %arg0, %arg1 : i32, i32
  }
  func.func @transform_3(%arg0: i32, %arg1: i32) -> (i32, i32) {
    %c0_i32 = arith.constant 0 : i32
    return %arg0, %arg1 : i32, i32
  }
}

</mosaic_0001>

<llo_original>
// kernel: tpu_custom_call.1
$region0: #{tpu_custom_call.1}
  #allocation0 [shape = 'u32[]', space=smem, size = 0x4, offset = 0x4, fixed_abs, tag = 'smem constant byte address 0x4 - core index']
  #allocation1 [shape = 'u32[72,128]{1,0:T(1,128)}', space=vmem, size = 0x9000, scoped, tag = 'internal scratch']
  %s0 = inlined_call_operand.vmem [shape: f32[8,1], index: 0, kind: input, shape index: {}]
  %s1 = inlined_call_operand.vmem [shape: f32[8,1], index: 1, kind: input, shape index: {}]
  %s2 = inlined_call_operand.vmem [shape: f32[8,256], index: 2, kind: input, shape index: {}]
  %s3 = inlined_call_operand.hbm [shape: f32[8,256], index: 3, kind: output, shape index: {}]
  %s4 = sld [smem:[#allocation0]]
  $region45: #{tpu_custom_call.1} parent=0
    _
  %s6 = ssub.s32 1, %s4
  %s7 = scalar_select 0, %s6, %s4
  $region1: #{tpu_custom_call.1} parent=0
    #allocation2 [shape = 'u8[8192]{0}', space=vmem, size = 0x2000, scoped, tag = 'output window, operand 0']
    #allocation3 [shape = 's32[2]{0}', space=sflag, size = 0x8, scoped, tag = 'scoped memory for tpu_custom_call.1']
    %8 = vsyncpa [#allocation3], 0
    %s9 = scalar_lea.sflag [#allocation3], 1
    %10 = vsyncpa %s9, 0
    loop: start=0, step=1, limit=4
    $region2: #{tpu_custom_call.1} parent=1 // loop_pre_header
      _
    $region3: #{tpu_custom_call.1} parent=1 // loop_header
      %s12 = sphi 0, %s16
      %p13 = scmp.ge.s32.totalorder %s12, 4
      %s19 = sphi 0, %s31
      %s20 = sphi 0, %s27
      %s21 = sphi 0, %s19
      %s22 = sphi 0, %s20
      %s23 = sphi 0, %s21
      %s24 = sphi 0, %s22
      %s32 = sphi 0, %s32
      %s34 = sphi 0, %s32
      %s35 = sphi 0, %s34
      %s49 = sphi 0, %s35
      %s53 = sphi 0, %s53
      %s55 = sphi 0, %s53
      %s56 = sphi 0, %s55
      %s70 = sphi 0, %s56
      %s78 = sphi 0, %s80
      %s81 = sphi 0, %s78
      %s82 = sphi 0, %s81
      %s98 = sphi 0, %s82
      %s106 = sphi 0, %s108
      %s109 = sphi 0, %s106
      %s110 = sphi 0, %s109
      %s126 = sphi 0, %s110
    $region4: #{tpu_custom_call.1} parent=1 // loop_header_branch
      %15 = sbr.rel (%p13) target = $region8
    $region5: #{tpu_custom_call.1} parent=1 // loop_body
      %s17 = ssub.s32 %s12, 1
      %s18 = ssub.s32 %s12, 2
      %s25 = sadd.s32 1, %s20
      %p26 = scmp.ge.s32.totalorder %s25, 2
      %s27 = scalar_select %p26, 0, %s25
      %s28 = sadd.s32 1, %s19
      %s29 = scalar_select %p26, %s28, %s19
      %p30 = scmp.ge.s32.totalorder %s29, 1
      %s31 = scalar_select %p30, 0, %s29
      %s33 = sadd.s32 %s32, 1
      %p36 = scmp.eq.s32.totalorder %s12, 1
      %p37 = scmp.ne.s32.totalorder %s32, %s34
      %p38 = scmp.eq.s32.totalorder %s12, 0
      %p39 = por %p37, %p38
      %p40 = scmp.ne.s32.totalorder %s32, %s34
      %p41 = scmp.eq.s32.totalorder %s17, 1
      %p42 = por %p40, %p41
      %p43 = scmp.ne.s32.totalorder %s34, %s35
      %p44 = scmp.eq.s32.totalorder %s17, 0
      %p45 = por %p43, %p44
      %p46 = scmp.ne.s32.totalorder %s34, %s35
      %p47 = scmp.eq.s32.totalorder %s18, 1
      %p48 = por %p46, %p47
      %p50 = scmp.ne.s32.totalorder %s35, %s49
      %p51 = scmp.eq.s32.totalorder %s18, 0
      %p52 = por %p50, %p51
      %s54 = sadd.s32 %s53, 1
      %p57 = scmp.eq.s32.totalorder %s12, 1
      %p58 = scmp.ne.s32.totalorder %s53, %s55
      %p59 = scmp.eq.s32.totalorder %s12, 0
      %p60 = por %p58, %p59
      %p61 = scmp.ne.s32.totalorder %s53, %s55
      %p62 = scmp.eq.s32.totalorder %s17, 1
      %p63 = por %p61, %p62
      %p64 = scmp.ne.s32.totalorder %s55, %s56
      %p65 = scmp.eq.s32.totalorder %s17, 0
      %p66 = por %p64, %p65
      %p67 = scmp.ne.s32.totalorder %s55, %s56
      %p68 = scmp.eq.s32.totalorder %s18, 1
      %p69 = por %p67, %p68
      %p71 = scmp.ne.s32.totalorder %s56, %s70
      %p72 = scmp.eq.s32.totalorder %s18, 0
      %p73 = por %p71, %p72
      %s74 = ssub.s32 %s19, %s31
      %s75 = ssub.s32 %s20, %s27
      %s76 = sor.u32 %s74, %s75
      %p77 = scmp.eq.s32.totalorder %s76, 0
      %s79 = sadd.s32 %s78, 1
      %s80 = scalar_select %p77, %s78, %s79
      %p83 = pneg %p77
      %p84 = scmp.eq.s32.totalorder %s12, 1
      %p85 = por %p83, %p84
      %p86 = scmp.ne.s32.totalorder %s78, %s81
      %p87 = scmp.eq.s32.totalorder %s12, 0
      %p88 = por %p86, %p87
      %p89 = scmp.ne.s32.totalorder %s78, %s81
      %p90 = scmp.eq.s32.totalorder %s17, 1
      %p91 = por %p89, %p90
      %p92 = scmp.ne.s32.totalorder %s81, %s82
      %p93 = scmp.eq.s32.totalorder %s17, 0
      %p94 = por %p92, %p93
      %p95 = scmp.ne.s32.totalorder %s81, %s82
      %p96 = scmp.eq.s32.totalorder %s18, 1
      %p97 = por %p95, %p96
      %p99 = scmp.ne.s32.totalorder %s82, %s98
      %p100 = scmp.eq.s32.totalorder %s18, 0
      %p101 = por %p99, %p100
      %s102 = ssub.s32 %s19, %s31
      %s103 = ssub.s32 %s20, %s27
      %s104 = sor.u32 %s102, %s103
      %p105 = scmp.eq.s32.totalorder %s104, 0
      %s107 = sadd.s32 %s106, 1
      %s108 = scalar_select %p105, %s106, %s107
      %p111 = pneg %p105
      %p112 = scmp.eq.s32.totalorder %s12, 1
      %p113 = por %p111, %p112
      %p114 = scmp.ne.s32.totalorder %s106, %s109
      %p115 = scmp.eq.s32.totalorder %s12, 0
      %p116 = por %p114, %p115
      %p117 = scmp.ne.s32.totalorder %s106, %s109
      %p118 = scmp.eq.s32.totalorder %s17, 1
      %p119 = por %p117, %p118
      %p120 = scmp.ne.s32.totalorder %s109, %s110
      %p121 = scmp.eq.s32.totalorder %s17, 0
      %p122 = por %p120, %p121
      %p123 = scmp.ne.s32.totalorder %s109, %s110
      %p124 = scmp.eq.s32.totalorder %s18, 1
      %p125 = por %p123, %p124
      %p127 = scmp.ne.s32.totalorder %s110, %s126
      %p128 = scmp.eq.s32.totalorder %s18, 0
      %p129 = por %p127, %p128
      %p130 = scmp.le.s32.totalorder 1, %s12
      %p131 = scmp.lt.s32.totalorder %s12, 3
      %p132 = pnand %p130, %p131
      %p133 = pneg %p132
      // Predicated region
      $region9: #{tpu_custom_call.1} parent=5 // pred_check
        _
      $region10: #{tpu_custom_call.1} parent=5 // pred_check_branch
        %135 = sbr.rel (%p132) target = $region12
      $region11: #{tpu_custom_call.1} parent=5 // pred_region
        %s136 = ssub.s32 %s12, 1
        // Predicated region
        $region13: #{tpu_custom_call.1} parent=11 // pred_check
          %p137 = pneg %p45
        $region14: #{tpu_custom_call.1} parent=11 // pred_check_branch
          %139 = sbr.rel (%p137) target = $region16
        $region15: #{tpu_custom_call.1} parent=11 // pred_region
          _
        $region16: #{tpu_custom_call.1} parent=11 // pred_fallthru
          _
        // Predicated region
        $region17: #{tpu_custom_call.1} parent=11 // pred_check
          %p140 = pneg %p66
        $region18: #{tpu_custom_call.1} parent=11 // pred_check_branch
          %142 = sbr.rel (%p140) target = $region20
        $region19: #{tpu_custom_call.1} parent=11 // pred_region
          _
        $region20: #{tpu_custom_call.1} parent=11 // pred_fallthru
          _
      $region12: #{tpu_custom_call.1} parent=5 // pred_fallthru
        _
      %p143 = scmp.lt.s32.totalorder %s12, 2
      // Predicated region
      $region21: #{tpu_custom_call.1} parent=5 // pred_check
        %p144 = pneg %p143
      $region22: #{tpu_custom_call.1} parent=5 // pred_check_branch
        %146 = sbr.rel (%p144) target = $region24
      $region23: #{tpu_custom_call.1} parent=5 // pred_region
        // Predicated region
        $region25: #{tpu_custom_call.1} parent=23 // pred_check
          %p147 = pneg %p88
        $region26: #{tpu_custom_call.1} parent=23 // pred_check_branch
          %149 = sbr.rel (%p147) target = $region28
        $region27: #{tpu_custom_call.1} parent=23 // pred_region
          %p150 = scmp.lt.s32.totalorder %s19, 0
          %s151 = scalar_select %p150, %s19, 0
          %p152 = scmp.lt.s32.totalorder %s20, 1
          %s153 = scalar_select %p152, %s20, 1
          %s154 = smul.addr %s151, 2
          %s155 = sadd.s32 %s153, %s154
          %s156 = smul.addr %s155, 8
          %s157 = scalar_lea.vmem %s2, %s156
        $region28: #{tpu_custom_call.1} parent=23 // pred_fallthru
          _
      $region24: #{tpu_custom_call.1} parent=5 // pred_fallthru
        _
      %p158 = scmp.le.s32.totalorder 1, %s12
      %p159 = scmp.lt.s32.totalorder %s12, 3
      %p160 = pnand %p158, %p159
      %p161 = pneg %p160
      // Predicated region
      $region29: #{tpu_custom_call.1} parent=5 // pred_check
        _
      $region30: #{tpu_custom_call.1} parent=5 // pred_check_branch
        %163 = sbr.rel (%p160) target = $region32
      $region31: #{tpu_custom_call.1} parent=5 // pred_region
        %s164 = ssub.s32 %s12, 1
        %p165 = pneg %p45
        %p166 = pneg %p42
        %p167 = pneg %p66
        %p168 = pneg %p63
        %p169 = scmp.lt.s32.totalorder %s21, 0
        %s170 = scalar_select %p169, %s21, 0
        %p171 = scmp.lt.s32.totalorder %s22, 1
        %s172 = scalar_select %p171, %s22, 1
        %s173 = smul.addr %s170, 2
        %s174 = sadd.s32 %s172, %s173
        %s175 = smul.addr %s174, 8
        %s176 = scalar_lea.vmem %s2, %s175
        %p177 = pneg %p94
        %p178 = pneg %p91
        %p179 = pneg %p122
        %p180 = pneg %p119
        %s181 = sand.u32 %s109, 1
        %s182 = scalar_lea.sflag [#allocation3], %s181
        %s183 = sand.u32 %s109, 1
        %s184 = smul.addr %s183, 8
        %s185 = scalar_lea.vmem [#allocation2], %s184
        %p186 = scmp.lt.s32.totalorder %s21, 0
        %s187 = scalar_select %p186, %s21, 0
        %p188 = scmp.lt.s32.totalorder %s22, 1
        %s189 = scalar_select %p188, %s22, 1
        %s190 = smul.addr %s187, 2
        %s191 = sadd.s32 %s189, %s190
        %s192 = smul.addr %s191, 8
        %s193 = scalar_lea.vmem %s2, %s192
        %s194 = smul.u32 %s21, 8
        %s195 = scalar_lea.vmem %s0, %s194
        %v196 = vld [vmem:[%s195] sm:$0xff]
        %s197 = scalar_lea.vmem %s1, %s194
        %v198 = vld [vmem:[%s197] sm:$0xff]
        %v199 = vld [vmem:[%s193] sm:$0xff]
        %201 = vset.pattern.permute.xlu0 0
        %202 = vperm.xlu0 %201, %v196
        %v203 = vpop.permute.xlu0 %202
        %v205 = vmul.f32 %v199, %v203
        %207 = vset.pattern.permute.xlu0 0
        %208 = vperm.xlu0 %207, %v198
        %v209 = vpop.permute.xlu0 %208
        %v211 = vadd.f32 %v205, %v209
        %212 = vst [vmem:[%s185] sm:$0xff] %v211
        %s213 = sand.u32 %s109, 1
        %s214 = scalar_lea.sflag [#allocation3], %s213
        %s215 = sand.u32 %s109, 1
        %s216 = smul.addr %s215, 8
        %s217 = scalar_lea.vmem [#allocation2], %s216
        // Predicated region
        $region33: #{tpu_custom_call.1} parent=31 // pred_check
          %p218 = pneg %p119
        $region34: #{tpu_custom_call.1} parent=31 // pred_check_branch
          %220 = sbr.rel (%p218) target = $region36
        $region35: #{tpu_custom_call.1} parent=31 // pred_region
          %222 = vsyncadd %s214, 0
          %s223 = smul.addr %s21, 2
          %s224 = sadd.s32 %s22, %s223
          %s225 = smul.addr %s224, 8
          %s226 = scalar_lea.hbm %s3, %s225
          %s228 = sshll.u32 %s217, 4
          %s229 = int_to_ptr.vmem [resolvable:$true] %s228
          %s230 = sshll.u32 %s226, 4
          %s231 = int_to_ptr.hbm [resolvable:$true] %s230
          %233 = dma.vmem_to_hbm [thread:$0]  %s229, 128, %s231, %s214
        $region36: #{tpu_custom_call.1} parent=31 // pred_fallthru
          _
      $region32: #{tpu_custom_call.1} parent=5 // pred_fallthru
        _
      %p234 = scmp.le.s32.totalorder 2, %s12
      // Predicated region
      $region37: #{tpu_custom_call.1} parent=5 // pred_check
        %p235 = pneg %p234
      $region38: #{tpu_custom_call.1} parent=5 // pred_check_branch
        %237 = sbr.rel (%p235) target = $region40
      $region39: #{tpu_custom_call.1} parent=5 // pred_region
        %s238 = ssub.s32 %s12, 2
        // Predicated region
        $region41: #{tpu_custom_call.1} parent=39 // pred_check
          %p239 = pneg %p125
        $region42: #{tpu_custom_call.1} parent=39 // pred_check_branch
          %241 = sbr.rel (%p239) target = $region44
        $region43: #{tpu_custom_call.1} parent=39 // pred_region
          %s242 = sand.u32 %s110, 1
          %s243 = scalar_lea.sflag [#allocation3], %s242
          %s244 = sand.u32 %s110, 1
          %s245 = smul.addr %s244, 8
          %s246 = scalar_lea.vmem [#allocation2], %s245
          %248 = dma.done %s243, 128
        $region44: #{tpu_custom_call.1} parent=39 // pred_fallthru
          _
      $region40: #{tpu_custom_call.1} parent=5 // pred_fallthru
        _
    $region6: #{tpu_custom_call.1} parent=1 // loop_footer
      %s16 = sadd.s32 1, %s12
    $region7: #{tpu_custom_call.1} parent=1 // loop_footer_branch
      %11 = sbr.rel target = $region3
    $region8: #{tpu_custom_call.1} parent=1 // loop_exit
      _
    %249 = vsyncpa [#allocation3], 1
    %s250 = scalar_lea.sflag [#allocation3], 1
    %251 = vsyncpa %s250, 1

</llo_original>
